<compile_context>
chip_gen: v7x
topology: tpu7x:2x2x1
jax: 0.10.0
libtpu: 0.0.40
codegen_flags: <defaults>
</compile_context>

<pallas_src>
import numpy as np
import jax
import jax.numpy as jnp
from jax.experimental import pallas as pl
from jax.experimental.pallas import tpu as pltpu


# ---------------------------------------------------------------------------
# Fused kernel: one grid step per batch element.
#   x_ref    : (C, H*W)    channels on sublanes, pixels on lanes
#   w123_ref : (3*Cr, C)   centre taps of the three dilated 3x3 convs, stacked
#   b123_ref : (3*Cr, 1)
#   w4_ref   : (C, 3*Cr)   centre tap of the final 3x3 conv (BasicBlockSig)
#   b4_ref   : (C, 1)
#   out_ref  : (C, H*W)    x * sigmoid(gate)   (lane-dense store)
# ---------------------------------------------------------------------------
def calayer_kernel(x_ref, w123_ref, b123_ref, w4_ref, b4_ref, out_ref):
    x = x_ref[...]                                            # (C, HW) f32

    # AdaptiveAvgPool2d(1): global average pool over the spatial (lane) axis.
    pooled = jnp.mean(x, axis=1, keepdims=True)               # (C, 1)

    # c1/c2/c3 branches fused into a single matmul (+ bias, ReLU).
    c = jnp.dot(w123_ref[...], pooled,
                preferred_element_type=jnp.float32) + b123_ref[...]
    c = jnp.maximum(c, 0.0)                                   # (3*Cr, 1)

    # Final conv (centre tap) + sigmoid -> per-channel gate.
    g = jnp.dot(w4_ref[...], c,
                preferred_element_type=jnp.float32) + b4_ref[...]
    gate = jax.nn.sigmoid(g)                                  # (C, 1)

    # Channel-attention gating, broadcast over the lane (pixel) axis.
    out_ref[...] = x * gate                                   # (C, HW)


# ---------------------------------------------------------------------------
# Wrapper
# ---------------------------------------------------------------------------
def calayer_forward(x_nchw, params):
    B, C, H, W = x_nchw.shape
    HW = H * W
    Cr = params["w1"].shape[0]                 # channel // reduction
    C3 = 3 * Cr

    # Free reshape (no transpose): NCHW -> (B, C, H*W), pixels on lanes.
    x2d = x_nchw.reshape(B, C, HW)

    # A 3x3 conv with pad == dilation applied to a 1x1 map reduces exactly to
    # its centre tap -> 1x1 convs == small matmuls.  Stack the three branches.
    w1c = params["w1"][:, :, 1, 1]             # (Cr, C)
    w2c = params["w2"][:, :, 1, 1]
    w3c = params["w3"][:, :, 1, 1]
    w123 = jnp.concatenate([w1c, w2c, w3c], axis=0)                 # (3Cr, C)
    b123 = jnp.concatenate(
        [params["b1"], params["b2"], params["b3"]]).reshape(C3, 1)  # (3Cr, 1)
    w4c = params["w4"][:, :, 1, 1]             # (C, 3Cr)
    b4 = params["b4"].reshape(C, 1)            # (C, 1)

    const2 = lambda b: (0, 0)
    cost = pl.CostEstimate(
        flops=int(B * (2 * C * HW + 4 * C3 * C)),
        transcendentals=int(B * C),
        bytes_accessed=int(4 * (2 * B * C * HW + C3 * C + C3 + C * C3 + C)),
    )

    # NOTE: for large H*W the full (C, H*W) block would not fit v7x's 64 MiB
    # VMEM; that case needs a spatial-tile grid axis with a two-pass GAP.
    # At these shapes one full-image block per batch step is optimal.
    out = pl.pallas_call(
        calayer_kernel,
        grid=(B,),
        in_specs=[
            pl.BlockSpec((None, C, HW), lambda b: (b, 0, 0)),
            pl.BlockSpec((C3, C), const2),     # grid-invariant weights
            pl.BlockSpec((C3, 1), const2),
            pl.BlockSpec((C, C3), const2),
            pl.BlockSpec((C, 1), const2),
        ],
        out_specs=pl.BlockSpec((None, C, HW), lambda b: (b, 0, 0)),
        out_shape=jax.ShapeDtypeStruct((B, C, HW), jnp.float32),
        compiler_params=pltpu.CompilerParams(
            dimension_semantics=("parallel",)),
        cost_estimate=cost,
    )(x2d, w123, b123, w4c, b4)

    return out.reshape(B, C, H, W)


# ---------------------------------------------------------------------------
# Pure-JAX reference mirroring the PyTorch module (full dilated convs).
# ---------------------------------------------------------------------------
def reference_forward(x, p):
    def conv(inp, w, b, pad, dil):
        out = jax.lax.conv_general_dilated(
            inp, w, (1, 1), [(pad, pad), (pad, pad)],
            rhs_dilation=(dil, dil),
            dimension_numbers=("NCHW", "OIHW", "NCHW"))
        return out + b.reshape(1, -1, 1, 1)

    y = jnp.mean(x, axis=(2, 3), keepdims=True)                 # AdaptiveAvgPool2d(1)
    c1 = jnp.maximum(conv(y, p["w1"], p["b1"], 3, 3), 0.0)
    c2 = jnp.maximum(conv(y, p["w2"], p["b2"], 5, 5), 0.0)
    c3 = jnp.maximum(conv(y, p["w3"], p["b3"], 7, 7), 0.0)
    c_out = jnp.concatenate([c1, c2, c3], axis=1)
    gate = jax.nn.sigmoid(conv(c_out, p["w4"], p["b4"], 1, 1))
    return x * gate


def init_params(key, channel, reduction):
    cr = channel // reduction
    ks = jax.random.split(key, 8)
    f32 = jnp.float32
    return {
        # c1/c2/c3: Conv2d(channel, channel//reduction, 3, 1, pad=d, dilation=d)
        "w1": 0.1 * jax.random.normal(ks[0], (cr, channel, 3, 3), f32),
        "b1": 0.1 * jax.random.normal(ks[1], (cr,), f32),
        "w2": 0.1 * jax.random.normal(ks[2], (cr, channel, 3, 3), f32),
        "b2": 0.1 * jax.random.normal(ks[3], (cr,), f32),
        "w3": 0.1 * jax.random.normal(ks[4], (cr, channel, 3, 3), f32),
        "b3": 0.1 * jax.random.normal(ks[5], (cr,), f32),
        # c4: Conv2d(3 * channel//reduction, channel, 3, 1, pad=1) + Sigmoid
        "w4": 0.1 * jax.random.normal(ks[6], (channel, 3 * cr, 3, 3), f32),
        "b4": 0.1 * jax.random.normal(ks[7], (channel,), f32),
    }


if __name__ == "__main__":
    B, C, H, W, red = 2, 64, 16, 16, 16
    k_x, k_p = jax.random.split(jax.random.PRNGKey(0))
    x = jax.random.normal(k_x, (B, C, H, W), jnp.float32)
    params = init_params(k_p, C, red)

    fwd = jax.jit(calayer_forward)
    out = fwd(x, params)
    jax.block_until_ready(out)

    ref = reference_forward(x, params)
    assert out.shape == (B, C, H, W)
    np.testing.assert_allclose(np.asarray(out), np.asarray(ref),
                               atol=1e-4, rtol=1e-4)

    print("KERNEL_OK")
</pallas_src>

<mosaic_0001>
module attributes {stable_mosaic.version = 11 : i64} {
  func.func @calayer_kernel(%arg0: i32, %arg1: memref<1x64x256xf32, #tpu.memory_space<vmem>>, %arg2: memref<12x64xf32, #tpu.memory_space<vmem>>, %arg3: memref<12x1xf32, #tpu.memory_space<vmem>>, %arg4: memref<64x12xf32, #tpu.memory_space<vmem>>, %arg5: memref<64x1xf32, #tpu.memory_space<vmem>>, %arg6: memref<1x64x256xf32, #tpu.memory_space<vmem>>) attributes {dimension_semantics = [#tpu.dimension_semantics<parallel>], iteration_bounds = array<i64: 2>, scalar_prefetch = 0 : i64, scratch_operands = 0 : i64, tpu.core_type = #tpu.core_type<tc>, window_params = [{transform_indices = @transform_0, window_bounds = array<i64: 1, 64, 256>}, {pipeline_mode = #tpu.pipeline_mode<synchronous>, transform_indices = @transform_1, window_bounds = array<i64: 12, 64>}, {pipeline_mode = #tpu.pipeline_mode<synchronous>, transform_indices = @transform_2, window_bounds = array<i64: 12, 1>}, {pipeline_mode = #tpu.pipeline_mode<synchronous>, transform_indices = @transform_3, window_bounds = array<i64: 64, 12>}, {pipeline_mode = #tpu.pipeline_mode<synchronous>, transform_indices = @transform_4, window_bounds = array<i64: 64, 1>}, {transform_indices = @transform_5, window_bounds = array<i64: 1, 64, 256>}]} {
    %c0 = arith.constant 0 : index
    %c0_0 = arith.constant 0 : index
    %c0_1 = arith.constant 0 : index
    %0 = vector.load %arg1[%c0, %c0_0, %c0_1] : memref<1x64x256xf32, #tpu.memory_space<vmem>>, vector<1x64x256xf32>
    %1 = vector.shape_cast %0 : vector<1x64x256xf32> to vector<64x256xf32>
    %cst = arith.constant dense<0.000000e+00> : vector<64xf32>
    %2 = vector.multi_reduction <add>, %1, %cst [1] : vector<64x256xf32> to vector<64xf32>
    %3 = vector.shape_cast %2 : vector<64xf32> to vector<64x1xf32>
    %cst_2 = arith.constant 2.560000e+02 : f32
    %4 = vector.broadcast %cst_2 : f32 to vector<64x1xf32>
    %5 = arith.divf %3, %4 : vector<64x1xf32>
    %c0_3 = arith.constant 0 : index
    %c0_4 = arith.constant 0 : index
    %6 = vector.load %arg2[%c0_3, %c0_4] : memref<12x64xf32, #tpu.memory_space<vmem>>, vector<12x64xf32>
    %cst_5 = arith.constant dense<0.000000e+00> : vector<12x1xf32>
    %7 = tpu.matmul %6, %5, %cst_5 {dimension_numbers = #tpu.dot_dimension_numbers<[1], [0], [0], [1], [0, 0, 1, 1], [], []>} : vector<12x64xf32>, vector<64x1xf32>, vector<12x1xf32> -> vector<12x1xf32>
    %c0_6 = arith.constant 0 : index
    %c0_7 = arith.constant 0 : index
    %8 = vector.load %arg3[%c0_6, %c0_7] : memref<12x1xf32, #tpu.memory_space<vmem>>, vector<12x1xf32>
    %9 = arith.addf %7, %8 : vector<12x1xf32>
    %cst_8 = arith.constant 0.000000e+00 : f32
    %10 = vector.broadcast %cst_8 : f32 to vector<12x1xf32>
    %11 = arith.maximumf %9, %10 : vector<12x1xf32>
    %c0_9 = arith.constant 0 : index
    %c0_10 = arith.constant 0 : index
    %12 = vector.load %arg4[%c0_9, %c0_10] : memref<64x12xf32, #tpu.memory_space<vmem>>, vector<64x12xf32>
    %cst_11 = arith.constant dense<0.000000e+00> : vector<64x1xf32>
    %13 = tpu.matmul %12, %11, %cst_11 {dimension_numbers = #tpu.dot_dimension_numbers<[1], [0], [0], [1], [0, 0, 1, 1], [], []>} : vector<64x12xf32>, vector<12x1xf32>, vector<64x1xf32> -> vector<64x1xf32>
    %c0_12 = arith.constant 0 : index
    %c0_13 = arith.constant 0 : index
    %14 = vector.load %arg5[%c0_12, %c0_13] : memref<64x1xf32, #tpu.memory_space<vmem>>, vector<64x1xf32>
    %15 = arith.addf %13, %14 : vector<64x1xf32>
    %16 = arith.negf %15 : vector<64x1xf32>
    %17 = math.exp %16 : vector<64x1xf32>
    %cst_14 = arith.constant 1.000000e+00 : f32
    %18 = vector.broadcast %cst_14 : f32 to vector<64x1xf32>
    %19 = arith.addf %18, %17 : vector<64x1xf32>
    %20 = arith.divf %18, %19 : vector<64x1xf32>
    %21 = vector.broadcast %20 : vector<64x1xf32> to vector<64x256xf32>
    %22 = arith.mulf %1, %21 : vector<64x256xf32>
    %c0_15 = arith.constant 0 : index
    %c0_16 = arith.constant 0 : index
    %c0_17 = arith.constant 0 : index
    %23 = vector.load %arg6[%c0_15, %c0_16, %c0_17] : memref<1x64x256xf32, #tpu.memory_space<vmem>>, vector<1x64x256xf32>
    %24 = vector.shape_cast %23 : vector<1x64x256xf32> to vector<64x256xf32>
    %25 = vector.shape_cast %22 : vector<64x256xf32> to vector<1x64x256xf32>
    tpu.vector_store %arg6[%c0_15, %c0_16, %c0_17], %25 {strides = array<i32>} : memref<1x64x256xf32, #tpu.memory_space<vmem>>, vector<1x64x256xf32>,
    return
  }
  func.func @transform_0(%arg0: i32) -> (i32, i32, i32) {
    %c0_i32 = arith.constant 0 : i32
    %c0_i32_0 = arith.constant 0 : i32
    %c0_i32_1 = arith.constant 0 : i32
    return %arg0, %c0_i32, %c0_i32_0 : i32, i32, i32
  }
  func.func @transform_1(%arg0: i32) -> (i32, i32) {
    %c0_i32 = arith.constant 0 : i32
    %c0_i32_0 = arith.constant 0 : i32
    %c0_i32_1 = arith.constant 0 : i32
    return %c0_i32, %c0_i32_0 : i32, i32
  }
  func.func @transform_2(%arg0: i32) -> (i32, i32) {
    %c0_i32 = arith.constant 0 : i32
    %c0_i32_0 = arith.constant 0 : i32
    %c0_i32_1 = arith.constant 0 : i32
    return %c0_i32, %c0_i32_0 : i32, i32
  }
  func.func @transform_3(%arg0: i32) -> (i32, i32) {
    %c0_i32 = arith.constant 0 : i32
    %c0_i32_0 = arith.constant 0 : i32
    %c0_i32_1 = arith.constant 0 : i32
    return %c0_i32, %c0_i32_0 : i32, i32
  }
  func.func @transform_4(%arg0: i32) -> (i32, i32) {
    %c0_i32 = arith.constant 0 : i32
    %c0_i32_0 = arith.constant 0 : i32
    %c0_i32_1 = arith.constant 0 : i32
    return %c0_i32, %c0_i32_0 : i32, i32
  }
  func.func @transform_5(%arg0: i32) -> (i32, i32, i32) {
    %c0_i32 = arith.constant 0 : i32
    %c0_i32_0 = arith.constant 0 : i32
    %c0_i32_1 = arith.constant 0 : i32
    return %arg0, %c0_i32, %c0_i32_0 : i32, i32, i32
  }
}

</mosaic_0001>

<llo_original>
// kernel: calayer_forward.1
$region0: #{calayer_forward.1}
  #allocation0 [shape = 'u32[]', space=smem, size = 0x4, offset = 0x4, fixed_abs, tag = 'smem constant byte address 0x4 - core index']
  #allocation1 [shape = 'u32[144,128]{1,0:T(1,128)}', space=vmem, size = 0x12000, scoped, tag = 'internal scratch']
  %s0 = inlined_call_operand.vmem [shape: f32[2,64,256], index: 0, kind: input, shape index: {}]
  %s1 = inlined_call_operand.vmem [shape: f32[12,64], index: 1, kind: input, shape index: {}]
  %s2 = inlined_call_operand.vmem [shape: f32[12,1], index: 2, kind: input, shape index: {}]
  %s3 = inlined_call_operand.vmem [shape: f32[64,12], index: 3, kind: input, shape index: {}]
  %s4 = inlined_call_operand.vmem [shape: f32[64,1], index: 4, kind: input, shape index: {}]
  %s5 = inlined_call_operand.vmem [shape: f32[2,64,256], index: 5, kind: output, shape index: {}]
  %s6 = sld [smem:[#allocation0]]
  $region53: #{calayer_forward.1} parent=0
    _
  %s8 = ssub.s32 1, %s6
  %s9 = scalar_select 0, %s8, %s6
  loop: start=0, step=1, limit=4
  $region2: #{calayer_forward.1} parent=0 // loop_pre_header
    _
  $region3: #{calayer_forward.1} parent=0 // loop_header
    %s11 = sphi 0, %s15
    %p12 = scmp.ge.s32.totalorder %s11, 4
    %s21 = sphi 0, %s23
    %s24 = sphi 0, %s21
    %s25 = sphi 0, %s24
    %s41 = sphi 0, %s25
    %s45 = sphi 0, %s45
    %s47 = sphi 0, %s45
    %s48 = sphi 0, %s47
    %s62 = sphi 0, %s48
    %s66 = sphi 0, %s66
    %s68 = sphi 0, %s66
    %s69 = sphi 0, %s68
    %s83 = sphi 0, %s69
    %s87 = sphi 0, %s87
    %s89 = sphi 0, %s87
    %s90 = sphi 0, %s89
    %s104 = sphi 0, %s90
    %s108 = sphi 0, %s108
    %s110 = sphi 0, %s108
    %s111 = sphi 0, %s110
    %s125 = sphi 0, %s111
    %s131 = sphi 0, %s133
    %s134 = sphi 0, %s131
    %s135 = sphi 0, %s134
    %s151 = sphi 0, %s135
  $region4: #{calayer_forward.1} parent=0 // loop_header_branch
    %14 = sbr.rel (%p12) target = $region8
  $region5: #{calayer_forward.1} parent=0 // loop_body
    %s16 = ssub.s32 %s11, 1
    %s17 = ssub.s32 %s11, 2
    %s18 = sadd.s32 %s11, 1
    %s19 = ssub.s32 %s11, %s18
    %p20 = scmp.eq.s32.totalorder %s19, 0
    %s22 = sadd.s32 %s21, 1
    %s23 = scalar_select %p20, %s21, %s22
    %p26 = pneg %p20
    %p27 = scmp.eq.s32.totalorder %s11, 1
    %p28 = por %p26, %p27
    %p29 = scmp.ne.s32.totalorder %s21, %s24
    %p30 = scmp.eq.s32.totalorder %s11, 0
    %p31 = por %p29, %p30
    %p32 = scmp.ne.s32.totalorder %s21, %s24
    %p33 = scmp.eq.s32.totalorder %s16, 1
    %p34 = por %p32, %p33
    %p35 = scmp.ne.s32.totalorder %s24, %s25
    %p36 = scmp.eq.s32.totalorder %s16, 0
    %p37 = por %p35, %p36
    %p38 = scmp.ne.s32.totalorder %s24, %s25
    %p39 = scmp.eq.s32.totalorder %s17, 1
    %p40 = por %p38, %p39
    %p42 = scmp.ne.s32.totalorder %s25, %s41
    %p43 = scmp.eq.s32.totalorder %s17, 0
    %p44 = por %p42, %p43
    %s46 = sadd.s32 %s45, 1
    %p49 = scmp.eq.s32.totalorder %s11, 1
    %p50 = scmp.ne.s32.totalorder %s45, %s47
    %p51 = scmp.eq.s32.totalorder %s11, 0
    %p52 = por %p50, %p51
    %p53 = scmp.ne.s32.totalorder %s45, %s47
    %p54 = scmp.eq.s32.totalorder %s16, 1
    %p55 = por %p53, %p54
    %p56 = scmp.ne.s32.totalorder %s47, %s48
    %p57 = scmp.eq.s32.totalorder %s16, 0
    %p58 = por %p56, %p57
    %p59 = scmp.ne.s32.totalorder %s47, %s48
    %p60 = scmp.eq.s32.totalorder %s17, 1
    %p61 = por %p59, %p60
    %p63 = scmp.ne.s32.totalorder %s48, %s62
    %p64 = scmp.eq.s32.totalorder %s17, 0
    %p65 = por %p63, %p64
    %s67 = sadd.s32 %s66, 1
    %p70 = scmp.eq.s32.totalorder %s11, 1
    %p71 = scmp.ne.s32.totalorder %s66, %s68
    %p72 = scmp.eq.s32.totalorder %s11, 0
    %p73 = por %p71, %p72
    %p74 = scmp.ne.s32.totalorder %s66, %s68
    %p75 = scmp.eq.s32.totalorder %s16, 1
    %p76 = por %p74, %p75
    %p77 = scmp.ne.s32.totalorder %s68, %s69
    %p78 = scmp.eq.s32.totalorder %s16, 0
    %p79 = por %p77, %p78
    %p80 = scmp.ne.s32.totalorder %s68, %s69
    %p81 = scmp.eq.s32.totalorder %s17, 1
    %p82 = por %p80, %p81
    %p84 = scmp.ne.s32.totalorder %s69, %s83
    %p85 = scmp.eq.s32.totalorder %s17, 0
    %p86 = por %p84, %p85
    %s88 = sadd.s32 %s87, 1
    %p91 = scmp.eq.s32.totalorder %s11, 1
    %p92 = scmp.ne.s32.totalorder %s87, %s89
    %p93 = scmp.eq.s32.totalorder %s11, 0
    %p94 = por %p92, %p93
    %p95 = scmp.ne.s32.totalorder %s87, %s89
    %p96 = scmp.eq.s32.totalorder %s16, 1
    %p97 = por %p95, %p96
    %p98 = scmp.ne.s32.totalorder %s89, %s90
    %p99 = scmp.eq.s32.totalorder %s16, 0
    %p100 = por %p98, %p99
    %p101 = scmp.ne.s32.totalorder %s89, %s90
    %p102 = scmp.eq.s32.totalorder %s17, 1
    %p103 = por %p101, %p102
    %p105 = scmp.ne.s32.totalorder %s90, %s104
    %p106 = scmp.eq.s32.totalorder %s17, 0
    %p107 = por %p105, %p106
    %s109 = sadd.s32 %s108, 1
    %p112 = scmp.eq.s32.totalorder %s11, 1
    %p113 = scmp.ne.s32.totalorder %s108, %s110
    %p114 = scmp.eq.s32.totalorder %s11, 0
    %p115 = por %p113, %p114
    %p116 = scmp.ne.s32.totalorder %s108, %s110
    %p117 = scmp.eq.s32.totalorder %s16, 1
    %p118 = por %p116, %p117
    %p119 = scmp.ne.s32.totalorder %s110, %s111
    %p120 = scmp.eq.s32.totalorder %s16, 0
    %p121 = por %p119, %p120
    %p122 = scmp.ne.s32.totalorder %s110, %s111
    %p123 = scmp.eq.s32.totalorder %s17, 1
    %p124 = por %p122, %p123
    %p126 = scmp.ne.s32.totalorder %s111, %s125
    %p127 = scmp.eq.s32.totalorder %s17, 0
    %p128 = por %p126, %p127
    %s129 = ssub.s32 %s11, %s18
    %p130 = scmp.eq.s32.totalorder %s129, 0
    %s132 = sadd.s32 %s131, 1
    %s133 = scalar_select %p130, %s131, %s132
    %p136 = pneg %p130
    %p137 = scmp.eq.s32.totalorder %s11, 1
    %p138 = por %p136, %p137
    %p139 = scmp.ne.s32.totalorder %s131, %s134
    %p140 = scmp.eq.s32.totalorder %s11, 0
    %p141 = por %p139, %p140
    %p142 = scmp.ne.s32.totalorder %s131, %s134
    %p143 = scmp.eq.s32.totalorder %s16, 1
    %p144 = por %p142, %p143
    %p145 = scmp.ne.s32.totalorder %s134, %s135
    %p146 = scmp.eq.s32.totalorder %s16, 0
    %p147 = por %p145, %p146
    %p148 = scmp.ne.s32.totalorder %s134, %s135
    %p149 = scmp.eq.s32.totalorder %s17, 1
    %p150 = por %p148, %p149
    %p152 = scmp.ne.s32.totalorder %s135, %s151
    %p153 = scmp.eq.s32.totalorder %s17, 0
    %p154 = por %p152, %p153
    %p155 = scmp.le.s32.totalorder 1, %s11
    %p156 = scmp.lt.s32.totalorder %s11, 3
    %p157 = pnand %p155, %p156
    %p158 = pneg %p157
    // Predicated region
    $region9: #{calayer_forward.1} parent=5 // pred_check
      _
    $region10: #{calayer_forward.1} parent=5 // pred_check_branch
      %160 = sbr.rel (%p157) target = $region12
    $region11: #{calayer_forward.1} parent=5 // pred_region
      %s161 = ssub.s32 %s11, 1
      // Predicated region
      $region13: #{calayer_forward.1} parent=11 // pred_check
        %p162 = pneg %p58
      $region14: #{calayer_forward.1} parent=11 // pred_check_branch
        %164 = sbr.rel (%p162) target = $region16
      $region15: #{calayer_forward.1} parent=11 // pred_region
        _
      $region16: #{calayer_forward.1} parent=11 // pred_fallthru
        _
      // Predicated region
      $region17: #{calayer_forward.1} parent=11 // pred_check
        %p165 = pneg %p79
      $region18: #{calayer_forward.1} parent=11 // pred_check_branch
        %167 = sbr.rel (%p165) target = $region20
      $region19: #{calayer_forward.1} parent=11 // pred_region
        _
      $region20: #{calayer_forward.1} parent=11 // pred_fallthru
        _
      // Predicated region
      $region21: #{calayer_forward.1} parent=11 // pred_check
        %p168 = pneg %p100
      $region22: #{calayer_forward.1} parent=11 // pred_check_branch
        %170 = sbr.rel (%p168) target = $region24
      $region23: #{calayer_forward.1} parent=11 // pred_region
        _
      $region24: #{calayer_forward.1} parent=11 // pred_fallthru
        _
      // Predicated region
      $region25: #{calayer_forward.1} parent=11 // pred_check
        %p171 = pneg %p121
      $region26: #{calayer_forward.1} parent=11 // pred_check_branch
        %173 = sbr.rel (%p171) target = $region28
      $region27: #{calayer_forward.1} parent=11 // pred_region
        _
      $region28: #{calayer_forward.1} parent=11 // pred_fallthru
        _
    $region12: #{calayer_forward.1} parent=5 // pred_fallthru
      _
    %p174 = scmp.lt.s32.totalorder %s11, 2
    // Predicated region
    $region29: #{calayer_forward.1} parent=5 // pred_check
      %p175 = pneg %p174
    $region30: #{calayer_forward.1} parent=5 // pred_check_branch
      %177 = sbr.rel (%p175) target = $region32
    $region31: #{calayer_forward.1} parent=5 // pred_region
      // Predicated region
      $region33: #{calayer_forward.1} parent=31 // pred_check
        %p178 = pneg %p31
      $region34: #{calayer_forward.1} parent=31 // pred_check_branch
        %180 = sbr.rel (%p178) target = $region36
      $region35: #{calayer_forward.1} parent=31 // pred_region
        %p181 = scmp.lt.s32.totalorder %s11, 1
        %s182 = scalar_select %p181, %s11, 1
        %s183 = smul.addr %s182, 16
        %s184 = smul.addr %s183, 8
        %s185 = scalar_lea.vmem %s0, %s184
      $region36: #{calayer_forward.1} parent=31 // pred_fallthru
        _
    $region32: #{calayer_forward.1} parent=5 // pred_fallthru
      _
    %p186 = scmp.le.s32.totalorder 1, %s11
    %p187 = scmp.lt.s32.totalorder %s11, 3
    %p188 = pnand %p186, %p187
    %p189 = pneg %p188
    // Predicated region
    $region37: #{calayer_forward.1} parent=5 // pred_check
      _
    $region38: #{calayer_forward.1} parent=5 // pred_check_branch
      %191 = sbr.rel (%p188) target = $region40
    $region39: #{calayer_forward.1} parent=5 // pred_region
      %s192 = ssub.s32 %s11, 1
      %p193 = scmp.lt.s32.totalorder %s16, 1
      %s194 = scalar_select %p193, %s16, 1
      %s195 = smul.addr %s194, 16
      %s196 = smul.addr %s195, 8
      %s197 = scalar_lea.vmem %s0, %s196
      %p198 = pneg %p37
      %p199 = pneg %p34
      %p200 = pneg %p58
      %p201 = pneg %p55
      %p202 = pneg %p79
      %p203 = pneg %p76
      %p204 = pneg %p100
      %p205 = pneg %p97
      %p206 = pneg %p121
      %p207 = pneg %p118
      %p208 = pneg %p147
      %p209 = pneg %p144
      %p210 = scmp.lt.s32.totalorder %s16, 1
      %s211 = scalar_select %p210, %s16, 1
      %s212 = smul.addr %s211, 16
      %s213 = smul.addr %s212, 8
      %s214 = scalar_lea.vmem %s5, %s213
      %p215 = scmp.lt.s32.totalorder %s16, 1
      %s216 = scalar_select %p215, %s16, 1
      %s217 = smul.addr %s216, 16
      %s218 = smul.addr %s217, 8
      %s219 = scalar_lea.vmem %s0, %s218
      %p220 = scmp.lt.s32.totalorder %s16, 1
      %s221 = scalar_select %p220, %s16, 1
      %s222 = smul.addr %s221, 16
      %s223 = smul.addr %s222, 8
      %s224 = scalar_lea.vmem %s5, %s223
      %v225 = vld [vmem:[%s219] sm:$0xff]
      %v226 = vld [vmem:[%s219 + $0x8] sm:$0xff]
      %v227 = vld [vmem:[%s219 + $0x10] sm:$0xff]
      %v228 = vld [vmem:[%s219 + $0x18] sm:$0xff]
      %v229 = vld [vmem:[%s219 + $0x20] sm:$0xff]
      %v230 = vld [vmem:[%s219 + $0x28] sm:$0xff]
      %v231 = vld [vmem:[%s219 + $0x30] sm:$0xff]
      %v232 = vld [vmem:[%s219 + $0x38] sm:$0xff]
      %v233 = vld [vmem:[%s219 + $0x40] sm:$0xff]
      %v234 = vld [vmem:[%s219 + $0x48] sm:$0xff]
      %v235 = vld [vmem:[%s219 + $0x50] sm:$0xff]
      %v236 = vld [vmem:[%s219 + $0x58] sm:$0xff]
      %v237 = vld [vmem:[%s219 + $0x60] sm:$0xff]
      %v238 = vld [vmem:[%s219 + $0x68] sm:$0xff]
      %v239 = vld [vmem:[%s219 + $0x70] sm:$0xff]
      %v240 = vld [vmem:[%s219 + $0x78] sm:$0xff]
      %v241 = vadd.f32 %v225, %v226
      %242 = vadd.xlane.f32.xlu0 %v241
      %v243 = vpop.xlane.xlu0 %242
      %v244 = vadd.f32 %v227, %v228
      %245 = vadd.xlane.f32.xlu0 %v244
      %v246 = vpop.xlane.xlu0 %245
      %v247 = vadd.f32 %v229, %v230
      %248 = vadd.xlane.f32.xlu0 %v247
      %v249 = vpop.xlane.xlu0 %248
      %v250 = vadd.f32 %v231, %v232
      %251 = vadd.xlane.f32.xlu0 %v250
      %v252 = vpop.xlane.xlu0 %251
      %v253 = vadd.f32 %v233, %v234
      %254 = vadd.xlane.f32.xlu0 %v253
      %v255 = vpop.xlane.xlu0 %254
      %v256 = vadd.f32 %v235, %v236
      %257 = vadd.xlane.f32.xlu0 %v256
      %v258 = vpop.xlane.xlu0 %257
      %v259 = vadd.f32 %v237, %v238
      %260 = vadd.xlane.f32.xlu0 %v259
      %v261 = vpop.xlane.xlu0 %260
      %v262 = vadd.f32 %v239, %v240
      %263 = vadd.xlane.f32.xlu0 %v262
      %v264 = vpop.xlane.xlu0 %263
      %v265 = vrcp.pop 256.0
      %v266 = vmul.f32 %v243, %v265
      %v267 = vmul.f32 %v246, %v265
      %v268 = vmul.f32 %v249, %v265
      %v269 = vmul.f32 %v252, %v265
      %v270 = vmul.f32 %v255, %v265
      %v271 = vmul.f32 %v258, %v265
      %v272 = vmul.f32 %v261, %v265
      %v273 = vmul.f32 %v264, %v265
      %v274 = vld [vmem:[%s1] sm:$0xff]
      %v275 = vld [vmem:[%s1 + $0x8] sm:$0xf]
      %v276 = vld [vmem:[%s2] sm:$0xff]
      %v277 = vld [vmem:[%s2 + $0x8] sm:$0xf]
      %vm278 = vcmask 523264
      %v280 = vsel %vm278, %v274, 0
      %v283 = vsel %vm278, %v275, 0
      %285 = vmatprep.subr.mxu0 0.0
      %286 = vmatpush1.msra.mxu0 %v266
      %287 = vmatprep.subr.mxu0 0.0
      %288 = vmatpush1.msra.mxu0 %v267
      %289 = vmatprep.subr.mxu0 0.0
      %290 = vmatpush1.msra.mxu0 %v268
      %291 = vmatprep.subr.mxu0 0.0
      %292 = vmatpush1.msra.mxu0 %v269
      %293 = vmatprep.subr.mxu0 0.0
      %294 = vmatpush1.msra.mxu0 %v270
      %295 = vmatprep.subr.mxu0 0.0
      %296 = vmatpush1.msra.mxu0 %v271
      %297 = vmatprep.subr.mxu0 0.0
      %298 = vmatpush1.msra.mxu0 %v272
      %299 = vmatprep.subr.mxu0 0.0
      %300 = vmatpush1.msra.mxu0 %v273
      %301 = vmatprep.subr.mxu0 0.0
      %302 = vmatpush1.msra.mxu0 0.0
      %303 = vmatprep.subr.mxu0 0.0
      %304 = vmatpush1.msra.mxu0 0.0
      %305 = vmatprep.subr.mxu0 0.0
      %306 = vmatpush1.msra.mxu0 0.0
      %307 = vmatprep.subr.mxu0 0.0
      %308 = vmatpush1.msra.mxu0 0.0
      %309 = vmatprep.subr.mxu0 0.0
      %310 = vmatpush1.msra.mxu0 0.0
      %311 = vmatprep.subr.mxu0 0.0
      %312 = vmatpush1.msra.mxu0 0.0
      %313 = vmatprep.subr.mxu0 0.0
      %314 = vmatpush1.msra.mxu0 0.0
      %315 = vmatprep.subr.mxu0 0.0
      %316 = vmatpush1.msra.mxu0 0.0
      %317 = vmatprep.subr.mxu0 0.0
      %318 = vmatpush1.msra.mxu0 0.0
      %319 = vmatprep.subr.mxu0 0.0
      %320 = vmatpush1.msra.mxu0 0.0
      %321 = vmatprep.subr.mxu0 0.0
      %322 = vmatpush1.msra.mxu0 0.0
      %323 = vmatprep.subr.mxu0 0.0
      %324 = vmatpush1.msra.mxu0 0.0
      %325 = vmatprep.subr.mxu0 0.0
      %326 = vmatpush1.msra.mxu0 0.0
      %327 = vmatprep.subr.mxu0 0.0
      %328 = vmatpush1.msra.mxu0 0.0
      %329 = vmatprep.subr.mxu0 0.0
      %330 = vmatpush1.msra.mxu0 0.0
      %331 = vmatprep.subr.mxu0 0.0
      %332 = vmatpush1.msra.mxu0 0.0
      %333 = vmatprep.subr.mxu0 0.0
      %334 = vmatpush1.msra.mxu0 0.0
      %335 = vmatprep.subr.mxu0 0.0
      %336 = vmatpush1.msra.mxu0 0.0
      %337 = vmatprep.subr.mxu0 0.0
      %338 = vmatpush1.msra.mxu0 0.0
      %339 = vmatprep.subr.mxu0 0.0
      %340 = vmatpush1.msra.mxu0 0.0
      %341 = vmatprep.subr.mxu0 0.0
      %342 = vmatpush1.msra.mxu0 0.0
      %343 = vmatprep.subr.mxu0 0.0
      %344 = vmatpush1.msra.mxu0 0.0
      %345 = vmatprep.subr.mxu0 0.0
      %346 = vmatpush1.msra.mxu0 0.0
      %347 = vmatprep.subr.mxu0 0.0
      %348 = vmatpush1.msra.mxu0 0.0
      %349 = vmatprep.mubr.f32.mxu0 0.0
      %350 = vmatmul.mubr.f32.gmra.mrb[0].mxu0 %v280
      %v351 = vpop.f32.mrb[0].mxu0
      %v352 = vadd.f32 %v276, %v351
      %v353 = vpop.f32.mrb[0].mxu0
      %354 = vmatprep.mubr.f32.mxu0 0.0
      %355 = vmatmul.mubr.f32.gmra.mrb[0].mxu0 %v283
      %v356 = vpop.f32.mrb[0].mxu0
      %v357 = vadd.f32 %v277, %v356
      %v358 = vpop.f32.mrb[0].mxu0
      %359 = vdwg.mxu0
      %v360 = vmax.f32 %v352, 0.0
      %v361 = vmax.f32 %v357, 0.0
      %v362 = vld [vmem:[%s3] sm:$0xff]
      %v363 = vld [vmem:[%s3 + $0x8] sm:$0xff]
      %v364 = vld [vmem:[%s3 + $0x10] sm:$0xff]
      %v365 = vld [vmem:[%s3 + $0x18] sm:$0xff]
      %v366 = vld [vmem:[%s3 + $0x20] sm:$0xff]
      %v367 = vld [vmem:[%s3 + $0x28] sm:$0xff]
      %v368 = vld [vmem:[%s3 + $0x30] sm:$0xff]
      %v369 = vld [vmem:[%s3 + $0x38] sm:$0xff]
      %v370 = vld [vmem:[%s4] sm:$0xff]
      %v371 = vld [vmem:[%s4 + $0x8] sm:$0xff]
      %v372 = vld [vmem:[%s4 + $0x10] sm:$0xff]
      %v373 = vld [vmem:[%s4 + $0x18] sm:$0xff]
      %v374 = vld [vmem:[%s4 + $0x20] sm:$0xff]
      %v375 = vld [vmem:[%s4 + $0x28] sm:$0xff]
      %v376 = vld [vmem:[%s4 + $0x30] sm:$0xff]
      %v377 = vld [vmem:[%s4 + $0x38] sm:$0xff]
      %vm378 = vcmask 97280
      %v380 = vsel %vm378, %v362, 0
      %v383 = vsel %vm378, %v363, 0
      %v386 = vsel %vm378, %v364, 0
      %v389 = vsel %vm378, %v365, 0
      %v392 = vsel %vm378, %v366, 0
      %v395 = vsel %vm378, %v367, 0
      %v398 = vsel %vm378, %v368, 0
      %v401 = vsel %vm378, %v369, 0
      %vm403 = vcmask 1043456
      %v405 = vsel %vm403, %v361, 0
      %407 = vmatprep.subr.mxu0 0.0
      %408 = vmatpush1.msra.mxu0 %v360
      %409 = vmatprep.subr.mxu0 0.0
      %410 = vmatpush1.msra.mxu0 %v405
      %411 = vmatprep.subr.mxu0 0.0
      %412 = vmatpush1.msra.mxu0 0.0
      %413 = vmatprep.subr.mxu0 0.0
      %414 = vmatpush1.msra.mxu0 0.0
      %415 = vmatprep.subr.mxu0 0.0
      %416 = vmatpush1.msra.mxu0 0.0
      %417 = vmatprep.subr.mxu0 0.0
      %418 = vmatpush1.msra.mxu0 0.0
      %419 = vmatprep.subr.mxu0 0.0
      %420 = vmatpush1.msra.mxu0 0.0
      %421 = vmatprep.subr.mxu0 0.0
      %422 = vmatpush1.msra.mxu0 0.0
      %423 = vmatprep.subr.mxu0 0.0
      %424 = vmatpush1.msra.mxu0 0.0
      %425 = vmatprep.subr.mxu0 0.0
      %426 = vmatpush1.msra.mxu0 0.0
      %427 = vmatprep.subr.mxu0 0.0
      %428 = vmatpush1.msra.mxu0 0.0
      %429 = vmatprep.subr.mxu0 0.0
      %430 = vmatpush1.msra.mxu0 0.0
      %431 = vmatprep.subr.mxu0 0.0
      %432 = vmatpush1.msra.mxu0 0.0
      %433 = vmatprep.subr.mxu0 0.0
      %434 = vmatpush1.msra.mxu0 0.0
      %435 = vmatprep.subr.mxu0 0.0
      %436 = vmatpush1.msra.mxu0 0.0
      %437 = vmatprep.subr.mxu0 0.0
      %438 = vmatpush1.msra.mxu0 0.0
      %439 = vmatprep.subr.mxu0 0.0
      %440 = vmatpush1.msra.mxu0 0.0
      %441 = vmatprep.subr.mxu0 0.0
      %442 = vmatpush1.msra.mxu0 0.0
      %443 = vmatprep.subr.mxu0 0.0
      %444 = vmatpush1.msra.mxu0 0.0
      %445 = vmatprep.subr.mxu0 0.0
      %446 = vmatpush1.msra.mxu0 0.0
      %447 = vmatprep.subr.mxu0 0.0
      %448 = vmatpush1.msra.mxu0 0.0
      %449 = vmatprep.subr.mxu0 0.0
      %450 = vmatpush1.msra.mxu0 0.0
      %451 = vmatprep.subr.mxu0 0.0
      %452 = vmatpush1.msra.mxu0 0.0
      %453 = vmatprep.subr.mxu0 0.0
      %454 = vmatpush1.msra.mxu0 0.0
      %455 = vmatprep.subr.mxu0 0.0
      %456 = vmatpush1.msra.mxu0 0.0
      %457 = vmatprep.subr.mxu0 0.0
      %458 = vmatpush1.msra.mxu0 0.0
      %459 = vmatprep.subr.mxu0 0.0
      %460 = vmatpush1.msra.mxu0 0.0
      %461 = vmatprep.subr.mxu0 0.0
      %462 = vmatpush1.msra.mxu0 0.0
      %463 = vmatprep.subr.mxu0 0.0
      %464 = vmatpush1.msra.mxu0 0.0
      %465 = vmatprep.subr.mxu0 0.0
      %466 = vmatpush1.msra.mxu0 0.0
      %467 = vmatprep.subr.mxu0 0.0
      %468 = vmatpush1.msra.mxu0 0.0
      %469 = vmatprep.subr.mxu0 0.0
      %470 = vmatpush1.msra.mxu0 0.0
      %471 = vmatprep.mubr.f32.mxu0 0.0
      %472 = vmatmul.mubr.f32.gmra.mrb[0].mxu0 %v380
      %v473 = vpop.f32.mrb[0].mxu0
      %v474 = vadd.f32 %v370, %v473
      %v475 = vpop.f32.mrb[0].mxu0
      %476 = vmatprep.mubr.f32.mxu0 0.0
      %477 = vmatmul.mubr.f32.gmra.mrb[0].mxu0 %v383
      %v478 = vpop.f32.mrb[0].mxu0
      %v479 = vadd.f32 %v371, %v478
      %v480 = vpop.f32.mrb[0].mxu0
      %481 = vmatprep.mubr.f32.mxu0 0.0
      %482 = vmatmul.mubr.f32.gmra.mrb[0].mxu0 %v386
      %v483 = vpop.f32.mrb[0].mxu0
      %v484 = vadd.f32 %v372, %v483
      %v485 = vpop.f32.mrb[0].mxu0
      %486 = vmatprep.mubr.f32.mxu0 0.0
      %487 = vmatmul.mubr.f32.gmra.mrb[0].mxu0 %v389
      %v488 = vpop.f32.mrb[0].mxu0
      %v489 = vadd.f32 %v373, %v488
      %v490 = vpop.f32.mrb[0].mxu0
      %491 = vmatprep.mubr.f32.mxu0 0.0
      %492 = vmatmul.mubr.f32.gmra.mrb[0].mxu0 %v392
      %v493 = vpop.f32.mrb[0].mxu0
      %v494 = vadd.f32 %v374, %v493
      %v495 = vpop.f32.mrb[0].mxu0
      %496 = vmatprep.mubr.f32.mxu0 0.0
      %497 = vmatmul.mubr.f32.gmra.mrb[0].mxu0 %v395
      %v498 = vpop.f32.mrb[0].mxu0
      %v499 = vadd.f32 %v375, %v498
      %v500 = vpop.f32.mrb[0].mxu0
      %501 = vmatprep.mubr.f32.mxu0 0.0
      %502 = vmatmul.mubr.f32.gmra.mrb[0].mxu0 %v398
      %v503 = vpop.f32.mrb[0].mxu0
      %v504 = vadd.f32 %v376, %v503
      %v505 = vpop.f32.mrb[0].mxu0
      %506 = vmatprep.mubr.f32.mxu0 0.0
      %507 = vmatmul.mubr.f32.gmra.mrb[0].mxu0 %v401
      %v508 = vpop.f32.mrb[0].mxu0
      %v509 = vadd.f32 %v377, %v508
      %v510 = vpop.f32.mrb[0].mxu0
      %511 = vdwg.mxu0
      %v512 = vxor.u32 %v474, 2147483648
      %v513 = vxor.u32 %v479, 2147483648
      %v514 = vxor.u32 %v484, 2147483648
      %v515 = vxor.u32 %v489, 2147483648
      %v516 = vxor.u32 %v494, 2147483648
      %v517 = vxor.u32 %v499, 2147483648
      %v518 = vxor.u32 %v504, 2147483648
      %v519 = vxor.u32 %v509, 2147483648
      %v520 = vmul.f32 %v512, 1.442695
      %v521 = vpow.pop %v520
      %v522 = vmul.f32 %v513, 1.442695
      %v523 = vpow.pop %v522
      %v524 = vmul.f32 %v514, 1.442695
      %v525 = vpow.pop %v524
      %v526 = vmul.f32 %v515, 1.442695
      %v527 = vpow.pop %v526
      %v528 = vmul.f32 %v516, 1.442695
      %v529 = vpow.pop %v528
      %v530 = vmul.f32 %v517, 1.442695
      %v531 = vpow.pop %v530
      %v532 = vmul.f32 %v518, 1.442695
      %v533 = vpow.pop %v532
      %v534 = vmul.f32 %v519, 1.442695
      %v535 = vpow.pop %v534
      %v536 = vadd.f32 %v521, 1.0
      %v537 = vadd.f32 %v523, 1.0
      %v538 = vadd.f32 %v525, 1.0
      %v539 = vadd.f32 %v527, 1.0
      %v540 = vadd.f32 %v529, 1.0
      %v541 = vadd.f32 %v531, 1.0
      %v542 = vadd.f32 %v533, 1.0
      %v543 = vadd.f32 %v535, 1.0
      %v544 = vrcp.pop %v536
      %v545 = vmul.f32 1.0, %v544
      %v546 = vrcp.pop %v537
      %v547 = vmul.f32 1.0, %v546
      %v548 = vrcp.pop %v538
      %v549 = vmul.f32 1.0, %v548
      %v550 = vrcp.pop %v539
      %v551 = vmul.f32 1.0, %v550
      %v552 = vrcp.pop %v540
      %v553 = vmul.f32 1.0, %v552
      %v554 = vrcp.pop %v541
      %v555 = vmul.f32 1.0, %v554
      %v556 = vrcp.pop %v542
      %v557 = vmul.f32 1.0, %v556
      %v558 = vrcp.pop %v543
      %v559 = vmul.f32 1.0, %v558
      %561 = vset.pattern.permute.xlu0 0
      %562 = vperm.xlu0 %561, %v545
      %v563 = vpop.permute.xlu0 %562
      %566 = vset.pattern.permute.xlu0 0
      %567 = vperm.xlu0 %566, %v547
      %v568 = vpop.permute.xlu0 %567
      %571 = vset.pattern.permute.xlu0 0
      %572 = vperm.xlu0 %571, %v549
      %v573 = vpop.permute.xlu0 %572
      %576 = vset.pattern.permute.xlu0 0
      %577 = vperm.xlu0 %576, %v551
      %v578 = vpop.permute.xlu0 %577
      %581 = vset.pattern.permute.xlu0 0
      %582 = vperm.xlu0 %581, %v553
      %v583 = vpop.permute.xlu0 %582
      %586 = vset.pattern.permute.xlu0 0
      %587 = vperm.xlu0 %586, %v555
      %v588 = vpop.permute.xlu0 %587
      %591 = vset.pattern.permute.xlu0 0
      %592 = vperm.xlu0 %591, %v557
      %v593 = vpop.permute.xlu0 %592
      %596 = vset.pattern.permute.xlu0 0
      %597 = vperm.xlu0 %596, %v559
      %v598 = vpop.permute.xlu0 %597
      %v600 = vmul.f32 %v225, %v563
      %v601 = vmul.f32 %v226, %v563
      %v602 = vmul.f32 %v227, %v568
      %v603 = vmul.f32 %v228, %v568
      %v604 = vmul.f32 %v229, %v573
      %v605 = vmul.f32 %v230, %v573
      %v606 = vmul.f32 %v231, %v578
      %v607 = vmul.f32 %v232, %v578
      %v608 = vmul.f32 %v233, %v583
      %v609 = vmul.f32 %v234, %v583
      %v610 = vmul.f32 %v235, %v588
      %v611 = vmul.f32 %v236, %v588
      %v612 = vmul.f32 %v237, %v593
      %v613 = vmul.f32 %v238, %v593
      %v614 = vmul.f32 %v239, %v598
      %v615 = vmul.f32 %v240, %v598
      %616 = vst [vmem:[%s224] sm:$0xff] %v600
      %617 = vst [vmem:[%s224 + $0x8] sm:$0xff] %v601
      %618 = vst [vmem:[%s224 + $0x10] sm:$0xff] %v602
      %619 = vst [vmem:[%s224 + $0x18] sm:$0xff] %v603
      %620 = vst [vmem:[%s224 + $0x20] sm:$0xff] %v604
      %621 = vst [vmem:[%s224 + $0x28] sm:$0xff] %v605
      %622 = vst [vmem:[%s224 + $0x30] sm:$0xff] %v606
      %623 = vst [vmem:[%s224 + $0x38] sm:$0xff] %v607
      %624 = vst [vmem:[%s224 + $0x40] sm:$0xff] %v608
      %625 = vst [vmem:[%s224 + $0x48] sm:$0xff] %v609
      %626 = vst [vmem:[%s224 + $0x50] sm:$0xff] %v610
      %627 = vst [vmem:[%s224 + $0x58] sm:$0xff] %v611
      %628 = vst [vmem:[%s224 + $0x60] sm:$0xff] %v612
      %629 = vst [vmem:[%s224 + $0x68] sm:$0xff] %v613
      %630 = vst [vmem:[%s224 + $0x70] sm:$0xff] %v614
      %631 = vst [vmem:[%s224 + $0x78] sm:$0xff] %v615
      %p632 = scmp.lt.s32.totalorder %s16, 1
      %s633 = scalar_select %p632, %s16, 1
      %s634 = smul.addr %s633, 16
      %s635 = smul.addr %s634, 8
      %s636 = scalar_lea.vmem %s5, %s635
      // Predicated region
      $region41: #{calayer_forward.1} parent=39 // pred_check
        %p637 = pneg %p144
      $region42: #{calayer_forward.1} parent=39 // pred_check_branch
        %639 = sbr.rel (%p637) target = $region44
      $region43: #{calayer_forward.1} parent=39 // pred_region
        _
      $region44: #{calayer_forward.1} parent=39 // pred_fallthru
        _
    $region40: #{calayer_forward.1} parent=5 // pred_fallthru
      _
    %p640 = scmp.le.s32.totalorder 2, %s11
    // Predicated region
    $region45: #{calayer_forward.1} parent=5 // pred_check
      %p641 = pneg %p640
    $region46: #{calayer_forward.1} parent=5 // pred_check_branch
      %643 = sbr.rel (%p641) target = $region48
    $region47: #{calayer_forward.1} parent=5 // pred_region
      %s644 = ssub.s32 %s11, 2
      // Predicated region
      $region49: #{calayer_forward.1} parent=47 // pred_check
        %p645 = pneg %p150
      $region50: #{calayer_forward.1} parent=47 // pred_check_branch
        %647 = sbr.rel (%p645) target = $region52
      $region51: #{calayer_forward.1} parent=47 // pred_region
        %p648 = scmp.lt.s32.totalorder %s17, 1
        %s649 = scalar_select %p648, %s17, 1
        %s650 = smul.addr %s649, 16
        %s651 = smul.addr %s650, 8
        %s652 = scalar_lea.vmem %s5, %s651
      $region52: #{calayer_forward.1} parent=47 // pred_fallthru
        _
    $region48: #{calayer_forward.1} parent=5 // pred_fallthru
      _
  $region6: #{calayer_forward.1} parent=0 // loop_footer
    %s15 = sadd.s32 1, %s11
  $region7: #{calayer_forward.1} parent=0 // loop_footer_branch
    %10 = sbr.rel target = $region3
  $region8: #{calayer_forward.1} parent=0 // loop_exit
    _

</llo_original>
